<compile_context>
chip_gen: v7x
topology: tpu7x:2x2x1
jax: 0.10.0
libtpu: 0.0.40
codegen_flags: <defaults>
</compile_context>

<pallas_src>
import functools

import jax
import jax.numpy as jnp
from jax.experimental import pallas as pl
from jax.experimental.pallas import tpu as pltpu


def _embedding_gather_kernel(idx_ref, table_ref, out_ref):
    """One grid step: gather `row_tile` embedding rows via one-hot MXU matmul."""
    idx = idx_ref[...]                                     # (row_tile, 1) int32
    rows = idx.shape[0]
    vocab = table_ref.shape[0]
    col_ids = jax.lax.broadcasted_iota(jnp.int32, (rows, vocab), 1)
    one_hot = (col_ids == idx).astype(table_ref.dtype)     # (row_tile, vocab)
    out_ref[...] = jnp.dot(
        one_hot,
        table_ref[...],
        preferred_element_type=jnp.float32,
        precision=jax.lax.Precision.HIGHEST,               # exact row gather
    ).astype(out_ref.dtype)


@functools.partial(jax.jit, static_argnames=("num_neighboring_features", "row_tile"))
def kmer_multiple_embedding(x_dict, embedding_table, *,
                            num_neighboring_features=0, row_tile=256):
    """JAX/Pallas equivalent of KmerMultipleEmbedding.forward."""
    n_features = 2 * num_neighboring_features + 1
    vocab, out_channel = embedding_table.shape

    kmer = x_dict["kmer"]
    idx_flat = kmer.reshape(-1).astype(jnp.int32)           # torch .long() lookup indices
    total = idx_flat.shape[0]

    # Pad the flat index stream to a whole number of row tiles; pad rows gather
    # table[0] and are sliced off below.
    num_tiles = pl.cdiv(total, row_tile)
    padded = num_tiles * row_tile
    idx_padded = jnp.pad(idx_flat, (0, padded - total)).reshape(padded, 1)

    gathered = pl.pallas_call(
        _embedding_gather_kernel,
        out_shape=jax.ShapeDtypeStruct((padded, out_channel), embedding_table.dtype),
        grid_spec=pltpu.PrefetchScalarGridSpec(
            num_scalar_prefetch=0,
            grid=(num_tiles,),
            in_specs=[
                # (row_tile, 1) index block per grid step.
                pl.BlockSpec((row_tile, 1), lambda i: (i, 0)),
                # Whole embedding table, resident in VMEM (block index constant).
                pl.BlockSpec((vocab, out_channel), lambda i: (0, 0)),
            ],
            out_specs=pl.BlockSpec((row_tile, out_channel), lambda i: (i, 0)),
        ),
        compiler_params=pltpu.CompilerParams(
            dimension_semantics=("parallel",),          # shard rows across TCs (v7x)
            vmem_limit_bytes=32 * 1024 * 1024,          # portable across v5e/v6e/v7x
        ),
    )(idx_padded, embedding_table)

    kmer_emb = gathered[:total].reshape(-1, n_features * out_channel)
    # 'X' is untouched by the module -> no kernel / no copy.
    return {"X": x_dict["X"], "kmer": kmer_emb}


if __name__ == "__main__":
    key = jax.random.PRNGKey(0)
    k_tab, k_kmer, k_x = jax.random.split(key, 3)

    input_channel = 64           # k-mer vocabulary size (e.g. 3-mers: 4**3)
    output_channel = 128         # embedding dim -> lane-dense output blocks
    num_neighboring_features = 1
    n_features = 2 * num_neighboring_features + 1        # = 3

    batch, seq = 2, 8
    embedding_table = jax.random.normal(
        k_tab, (input_channel, output_channel), dtype=jnp.float32)
    kmer = jax.random.randint(
        k_kmer, (batch, seq, n_features), 0, input_channel, dtype=jnp.int32)
    X = jax.random.normal(k_x, (batch, seq, 9), dtype=jnp.float32)

    out = kmer_multiple_embedding(
        {"X": X, "kmer": kmer}, embedding_table,
        num_neighboring_features=num_neighboring_features,
        row_tile=16,  # small tile so the tiny demo exercises a multi-step grid
    )
    jax.block_until_ready(out["kmer"])
    jax.block_until_ready(out["X"])

    # Reference: nn.Embedding lookup + reshape.
    ref_kmer = jnp.take(embedding_table, kmer.reshape(-1), axis=0).reshape(
        -1, n_features * output_channel)

    assert out["X"].shape == X.shape and jnp.array_equal(out["X"], X)
    assert out["kmer"].shape == (batch * seq, n_features * output_channel)
    assert out["kmer"].dtype == embedding_table.dtype
    assert jnp.allclose(out["kmer"], ref_kmer, rtol=1e-2, atol=1e-5)

    print("KERNEL_OK")
</pallas_src>

<mosaic_0001>
module attributes {stable_mosaic.version = 11 : i64} {
  func.func @_embedding_gather_kernel(%arg0: i32, %arg1: memref<16x1xi32, #tpu.memory_space<vmem>>, %arg2: memref<64x128xf32, #tpu.memory_space<vmem>>, %arg3: memref<16x128xf32, #tpu.memory_space<vmem>>) attributes {dimension_semantics = [#tpu.dimension_semantics<parallel>], iteration_bounds = array<i64: 3>, scalar_prefetch = 0 : i64, scratch_operands = 0 : i64, tpu.core_type = #tpu.core_type<tc>, window_params = [{transform_indices = @transform_0, window_bounds = array<i64: 16, 1>}, {pipeline_mode = #tpu.pipeline_mode<synchronous>, transform_indices = @transform_1, window_bounds = array<i64: 64, 128>}, {transform_indices = @transform_2, window_bounds = array<i64: 16, 128>}]} {
    %c0 = arith.constant 0 : index
    %c0_0 = arith.constant 0 : index
    %0 = vector.load %arg1[%c0, %c0_0] : memref<16x1xi32, #tpu.memory_space<vmem>>, vector<16x1xi32>
    %1 = tpu.iota {dimensions = array<i32: 1>} : vector<16x64xi32>
    %2 = vector.broadcast %0 : vector<16x1xi32> to vector<16x64xi32>
    %3 = arith.cmpi eq, %1, %2 : vector<16x64xi32>
    %4 = arith.extui %3 : vector<16x64xi1> to vector<16x64xi32>
    %5 = arith.sitofp %4 : vector<16x64xi32> to vector<16x64xf32>
    %c0_1 = arith.constant 0 : index
    %c0_2 = arith.constant 0 : index
    %6 = vector.load %arg2[%c0_1, %c0_2] : memref<64x128xf32, #tpu.memory_space<vmem>>, vector<64x128xf32>
    %cst = arith.constant dense<0.000000e+00> : vector<16x128xf32>
    %7 = tpu.matmul %5, %6, %cst {dimension_numbers = #tpu.dot_dimension_numbers<[1], [0], [0], [1], [0, 0, 1, 1], [], []>, precision = #tpu.contract_precision<fp32>} : vector<16x64xf32>, vector<64x128xf32>, vector<16x128xf32> -> vector<16x128xf32>
    %c0_3 = arith.constant 0 : index
    %c0_4 = arith.constant 0 : index
    %8 = vector.load %arg3[%c0_3, %c0_4] : memref<16x128xf32, #tpu.memory_space<vmem>>, vector<16x128xf32>
    tpu.vector_store %arg3[%c0_3, %c0_4], %7 {strides = array<i32>} : memref<16x128xf32, #tpu.memory_space<vmem>>, vector<16x128xf32>,
    return
  }
  func.func @transform_0(%arg0: i32) -> (i32, i32) {
    %c0_i32 = arith.constant 0 : i32
    %c0_i32_0 = arith.constant 0 : i32
    return %arg0, %c0_i32 : i32, i32
  }
  func.func @transform_1(%arg0: i32) -> (i32, i32) {
    %c0_i32 = arith.constant 0 : i32
    %c0_i32_0 = arith.constant 0 : i32
    %c0_i32_1 = arith.constant 0 : i32
    return %c0_i32, %c0_i32_0 : i32, i32
  }
  func.func @transform_2(%arg0: i32) -> (i32, i32) {
    %c0_i32 = arith.constant 0 : i32
    %c0_i32_0 = arith.constant 0 : i32
    return %arg0, %c0_i32 : i32, i32
  }
}

</mosaic_0001>

<llo_original>
// kernel: kmer_multiple_embedding.1
$region0: #{kmer_multiple_embedding.1}
  #allocation0 [shape = 'u32[]', space=smem, size = 0x4, offset = 0x4, fixed_abs, tag = 'smem constant byte address 0x4 - core index']
  #allocation1 [shape = 'u32[144,128]{1,0:T(1,128)}', space=vmem, size = 0x12000, scoped, tag = 'internal scratch']
  %s0 = inlined_call_operand.vmem [shape: s32[48,1], index: 0, kind: input, shape index: {}]
  %s1 = inlined_call_operand.vmem [shape: f32[64,128], index: 1, kind: input, shape index: {}]
  %s2 = inlined_call_operand.vmem [shape: f32[48,128], index: 2, kind: output, shape index: {}]
  %s3 = sld [smem:[#allocation0]]
  $region41: #{kmer_multiple_embedding.1} parent=0
    _
  %s5 = ssub.s32 1, %s3
  %s6 = scalar_select 0, %s5, %s3
  loop: start=0, step=1, limit=5
  $region2: #{kmer_multiple_embedding.1} parent=0 // loop_pre_header
    _
  $region3: #{kmer_multiple_embedding.1} parent=0 // loop_header
    %s8 = sphi 0, %s12
    %p9 = scmp.ge.s32.totalorder %s8, 5
    %s18 = sphi 0, %s20
    %s21 = sphi 0, %s18
    %s22 = sphi 0, %s21
    %s38 = sphi 0, %s22
    %s42 = sphi 0, %s42
    %s44 = sphi 0, %s42
    %s45 = sphi 0, %s44
    %s59 = sphi 0, %s45
    %s65 = sphi 0, %s67
    %s68 = sphi 0, %s65
    %s69 = sphi 0, %s68
    %s85 = sphi 0, %s69
  $region4: #{kmer_multiple_embedding.1} parent=0 // loop_header_branch
    %11 = sbr.rel (%p9) target = $region8
  $region5: #{kmer_multiple_embedding.1} parent=0 // loop_body
    %s13 = ssub.s32 %s8, 1
    %s14 = ssub.s32 %s8, 2
    %s15 = sadd.s32 %s8, 1
    %s16 = ssub.s32 %s8, %s15
    %p17 = scmp.eq.s32.totalorder %s16, 0
    %s19 = sadd.s32 %s18, 1
    %s20 = scalar_select %p17, %s18, %s19
    %p23 = pneg %p17
    %p24 = scmp.eq.s32.totalorder %s8, 2
    %p25 = por %p23, %p24
    %p26 = scmp.ne.s32.totalorder %s18, %s21
    %p27 = scmp.eq.s32.totalorder %s8, 0
    %p28 = por %p26, %p27
    %p29 = scmp.ne.s32.totalorder %s18, %s21
    %p30 = scmp.eq.s32.totalorder %s13, 2
    %p31 = por %p29, %p30
    %p32 = scmp.ne.s32.totalorder %s21, %s22
    %p33 = scmp.eq.s32.totalorder %s13, 0
    %p34 = por %p32, %p33
    %p35 = scmp.ne.s32.totalorder %s21, %s22
    %p36 = scmp.eq.s32.totalorder %s14, 2
    %p37 = por %p35, %p36
    %p39 = scmp.ne.s32.totalorder %s22, %s38
    %p40 = scmp.eq.s32.totalorder %s14, 0
    %p41 = por %p39, %p40
    %s43 = sadd.s32 %s42, 1
    %p46 = scmp.eq.s32.totalorder %s8, 2
    %p47 = scmp.ne.s32.totalorder %s42, %s44
    %p48 = scmp.eq.s32.totalorder %s8, 0
    %p49 = por %p47, %p48
    %p50 = scmp.ne.s32.totalorder %s42, %s44
    %p51 = scmp.eq.s32.totalorder %s13, 2
    %p52 = por %p50, %p51
    %p53 = scmp.ne.s32.totalorder %s44, %s45
    %p54 = scmp.eq.s32.totalorder %s13, 0
    %p55 = por %p53, %p54
    %p56 = scmp.ne.s32.totalorder %s44, %s45
    %p57 = scmp.eq.s32.totalorder %s14, 2
    %p58 = por %p56, %p57
    %p60 = scmp.ne.s32.totalorder %s45, %s59
    %p61 = scmp.eq.s32.totalorder %s14, 0
    %p62 = por %p60, %p61
    %s63 = ssub.s32 %s8, %s15
    %p64 = scmp.eq.s32.totalorder %s63, 0
    %s66 = sadd.s32 %s65, 1
    %s67 = scalar_select %p64, %s65, %s66
    %p70 = pneg %p64
    %p71 = scmp.eq.s32.totalorder %s8, 2
    %p72 = por %p70, %p71
    %p73 = scmp.ne.s32.totalorder %s65, %s68
    %p74 = scmp.eq.s32.totalorder %s8, 0
    %p75 = por %p73, %p74
    %p76 = scmp.ne.s32.totalorder %s65, %s68
    %p77 = scmp.eq.s32.totalorder %s13, 2
    %p78 = por %p76, %p77
    %p79 = scmp.ne.s32.totalorder %s68, %s69
    %p80 = scmp.eq.s32.totalorder %s13, 0
    %p81 = por %p79, %p80
    %p82 = scmp.ne.s32.totalorder %s68, %s69
    %p83 = scmp.eq.s32.totalorder %s14, 2
    %p84 = por %p82, %p83
    %p86 = scmp.ne.s32.totalorder %s69, %s85
    %p87 = scmp.eq.s32.totalorder %s14, 0
    %p88 = por %p86, %p87
    %p89 = scmp.le.s32.totalorder 1, %s8
    %p90 = scmp.lt.s32.totalorder %s8, 4
    %p91 = pnand %p89, %p90
    %p92 = pneg %p91
    // Predicated region
    $region9: #{kmer_multiple_embedding.1} parent=5 // pred_check
      _
    $region10: #{kmer_multiple_embedding.1} parent=5 // pred_check_branch
      %94 = sbr.rel (%p91) target = $region12
    $region11: #{kmer_multiple_embedding.1} parent=5 // pred_region
      %s95 = ssub.s32 %s8, 1
      // Predicated region
      $region13: #{kmer_multiple_embedding.1} parent=11 // pred_check
        %p96 = pneg %p55
      $region14: #{kmer_multiple_embedding.1} parent=11 // pred_check_branch
        %98 = sbr.rel (%p96) target = $region16
      $region15: #{kmer_multiple_embedding.1} parent=11 // pred_region
        _
      $region16: #{kmer_multiple_embedding.1} parent=11 // pred_fallthru
        _
    $region12: #{kmer_multiple_embedding.1} parent=5 // pred_fallthru
      _
    %p99 = scmp.lt.s32.totalorder %s8, 3
    // Predicated region
    $region17: #{kmer_multiple_embedding.1} parent=5 // pred_check
      %p100 = pneg %p99
    $region18: #{kmer_multiple_embedding.1} parent=5 // pred_check_branch
      %102 = sbr.rel (%p100) target = $region20
    $region19: #{kmer_multiple_embedding.1} parent=5 // pred_region
      // Predicated region
      $region21: #{kmer_multiple_embedding.1} parent=19 // pred_check
        %p103 = pneg %p28
      $region22: #{kmer_multiple_embedding.1} parent=19 // pred_check_branch
        %105 = sbr.rel (%p103) target = $region24
      $region23: #{kmer_multiple_embedding.1} parent=19 // pred_region
        %s106 = smul.u32 2, %s8
        %p107 = scmp.lt.s32.totalorder %s106, 5
        %s108 = scalar_select %p107, %s106, 5
        %s109 = smul.addr %s108, 8
        %s110 = scalar_lea.vmem %s0, %s109
        %s111 = smul.u32 2, %s8
      $region24: #{kmer_multiple_embedding.1} parent=19 // pred_fallthru
        _
    $region20: #{kmer_multiple_embedding.1} parent=5 // pred_fallthru
      _
    %p112 = scmp.le.s32.totalorder 1, %s8
    %p113 = scmp.lt.s32.totalorder %s8, 4
    %p114 = pnand %p112, %p113
    %p115 = pneg %p114
    // Predicated region
    $region25: #{kmer_multiple_embedding.1} parent=5 // pred_check
      _
    $region26: #{kmer_multiple_embedding.1} parent=5 // pred_check_branch
      %117 = sbr.rel (%p114) target = $region28
    $region27: #{kmer_multiple_embedding.1} parent=5 // pred_region
      %s118 = ssub.s32 %s8, 1
      %s119 = smul.u32 2, %s13
      %p120 = scmp.lt.s32.totalorder %s119, 5
      %s121 = scalar_select %p120, %s119, 5
      %s122 = smul.addr %s121, 8
      %s123 = scalar_lea.vmem %s0, %s122
      %p124 = pneg %p34
      %p125 = pneg %p31
      %p126 = pneg %p55
      %p127 = pneg %p52
      %p128 = pneg %p81
      %p129 = pneg %p78
      %s130 = smul.u32 2, %s13
      %p131 = scmp.lt.s32.totalorder %s130, 5
      %s132 = scalar_select %p131, %s130, 5
      %s133 = smul.addr %s132, 8
      %s134 = scalar_lea.vmem %s2, %s133
      %s135 = smul.u32 2, %s13
      %p136 = scmp.lt.s32.totalorder %s135, 5
      %s137 = scalar_select %p136, %s135, 5
      %s138 = smul.addr %s137, 8
      %s139 = scalar_lea.vmem %s0, %s138
      %s140 = smul.u32 2, %s13
      %s141 = smul.u32 2, %s13
      %p142 = scmp.lt.s32.totalorder %s141, 5
      %s143 = scalar_select %p142, %s141, 5
      %s144 = smul.addr %s143, 8
      %s145 = scalar_lea.vmem %s2, %s144
      %s146 = smul.u32 2, %s13
      %v147 = vld [vmem:[%s139] sm:$0xff]
      %v148 = vld [vmem:[%s139 + $0x8] sm:$0xff]
      %v149 = vlaneseq
      %v150 = vand.u32 %v149, 127
      %151 = vset.pattern.permute.xlu0 0
      %152 = vperm.xlu0 %151, %v147
      %v153 = vpop.permute.xlu0 %152
      %154 = vset.pattern.permute.xlu0 0
      %155 = vperm.xlu0 %154, %v148
      %v156 = vpop.permute.xlu0 %155
      %vm157 = vcmp.eq.s32.totalorder %v150, %v153
      %vm158 = vcmp.eq.s32.totalorder %v150, %v156
      %v159 = vsel %vm157, 1, 0
      %v160 = vsel %vm158, 1, 0
      %v161 = vcvt.s32.f32 %v159
      %v162 = vcvt.s32.f32 %v160
      %v163 = vld [vmem:[%s1] sm:$0xff]
      %v164 = vld [vmem:[%s1 + $0x8] sm:$0xff]
      %v165 = vld [vmem:[%s1 + $0x10] sm:$0xff]
      %v166 = vld [vmem:[%s1 + $0x18] sm:$0xff]
      %v167 = vld [vmem:[%s1 + $0x20] sm:$0xff]
      %v168 = vld [vmem:[%s1 + $0x28] sm:$0xff]
      %v169 = vld [vmem:[%s1 + $0x30] sm:$0xff]
      %v170 = vld [vmem:[%s1 + $0x38] sm:$0xff]
      %vm171 = vcmask 523264
      %v173 = vsel %vm171, %v161, 0
      %v176 = vsel %vm171, %v162, 0
      %178 = vmatprep.subr.mxu0 0.0
      %v179 = vand.u32 %v163, 4294901760
      %180 = vmatpush1.msra.mxu0 %v179
      %181 = vmatprep.subr.mxu0 0.0
      %v182 = vand.u32 %v164, 4294901760
      %183 = vmatpush1.msra.mxu0 %v182
      %184 = vmatprep.subr.mxu0 0.0
      %v185 = vand.u32 %v165, 4294901760
      %186 = vmatpush1.msra.mxu0 %v185
      %187 = vmatprep.subr.mxu0 0.0
      %v188 = vand.u32 %v166, 4294901760
      %189 = vmatpush1.msra.mxu0 %v188
      %190 = vmatprep.subr.mxu0 0.0
      %v191 = vand.u32 %v167, 4294901760
      %192 = vmatpush1.msra.mxu0 %v191
      %193 = vmatprep.subr.mxu0 0.0
      %v194 = vand.u32 %v168, 4294901760
      %195 = vmatpush1.msra.mxu0 %v194
      %196 = vmatprep.subr.mxu0 0.0
      %v197 = vand.u32 %v169, 4294901760
      %198 = vmatpush1.msra.mxu0 %v197
      %199 = vmatprep.subr.mxu0 0.0
      %v200 = vand.u32 %v170, 4294901760
      %201 = vmatpush1.msra.mxu0 %v200
      %202 = vmatprep.subr.mxu0 0.0
      %203 = vmatpush1.msra.mxu0 0.0
      %204 = vmatprep.subr.mxu0 0.0
      %205 = vmatpush1.msra.mxu0 0.0
      %206 = vmatprep.subr.mxu0 0.0
      %207 = vmatpush1.msra.mxu0 0.0
      %208 = vmatprep.subr.mxu0 0.0
      %209 = vmatpush1.msra.mxu0 0.0
      %210 = vmatprep.subr.mxu0 0.0
      %211 = vmatpush1.msra.mxu0 0.0
      %212 = vmatprep.subr.mxu0 0.0
      %213 = vmatpush1.msra.mxu0 0.0
      %214 = vmatprep.subr.mxu0 0.0
      %215 = vmatpush1.msra.mxu0 0.0
      %216 = vmatprep.subr.mxu0 0.0
      %217 = vmatpush1.msra.mxu0 0.0
      %218 = vmatprep.subr.mxu0 0.0
      %219 = vmatpush1.msra.mxu0 0.0
      %220 = vmatprep.subr.mxu0 0.0
      %221 = vmatpush1.msra.mxu0 0.0
      %222 = vmatprep.subr.mxu0 0.0
      %223 = vmatpush1.msra.mxu0 0.0
      %224 = vmatprep.subr.mxu0 0.0
      %225 = vmatpush1.msra.mxu0 0.0
      %226 = vmatprep.subr.mxu0 0.0
      %227 = vmatpush1.msra.mxu0 0.0
      %228 = vmatprep.subr.mxu0 0.0
      %229 = vmatpush1.msra.mxu0 0.0
      %230 = vmatprep.subr.mxu0 0.0
      %231 = vmatpush1.msra.mxu0 0.0
      %232 = vmatprep.subr.mxu0 0.0
      %233 = vmatpush1.msra.mxu0 0.0
      %234 = vmatprep.subr.mxu0 0.0
      %235 = vmatpush1.msra.mxu0 0.0
      %236 = vmatprep.subr.mxu0 0.0
      %237 = vmatpush1.msra.mxu0 0.0
      %238 = vmatprep.subr.mxu0 0.0
      %239 = vmatpush1.msra.mxu0 0.0
      %240 = vmatprep.subr.mxu0 0.0
      %241 = vmatpush1.msra.mxu0 0.0
      %242 = vmatprep.subr.mxu0 0.0
      %243 = vmatpush1.msra.mxu0 0.0
      %244 = vmatprep.subr.mxu0 0.0
      %245 = vmatpush1.msra.mxu0 0.0
      %246 = vmatprep.subr.mxu0 0.0
      %247 = vmatpush1.msra.mxu0 0.0
      %248 = vmatprep.subr.mxu0 0.0
      %249 = vmatpush1.msra.mxu0 0.0
      %250 = vmatprep.mubr.f32.mxu0 0.0
      %v251 = vand.u32 %v173, 4294901760
      %v252 = vsub.f32 %v173, %v251
      %v253 = vand.u32 %v252, 4294901760
      %v254 = vsub.f32 %v252, %v253
      %v255 = vand.u32 %v254, 4294901760
      %256 = vmatmul.mubr.f32.gmra.mrb[0].mxu0 %v255
      %v257 = vpop.f32.mrb[0].mxu0
      %v258 = vadd.f32 0.0, %v257
      %v259 = vpop.f32.mrb[0].mxu0
      %260 = vmatprep.mubr.f32.mxu0 0.0
      %v261 = vand.u32 %v176, 4294901760
      %v262 = vsub.f32 %v176, %v261
      %v263 = vand.u32 %v262, 4294901760
      %v264 = vsub.f32 %v262, %v263
      %v265 = vand.u32 %v264, 4294901760
      %266 = vmatmul.mubr.f32.gmra.mrb[0].mxu0 %v265
      %v267 = vpop.f32.mrb[0].mxu0
      %v268 = vadd.f32 0.0, %v267
      %v269 = vpop.f32.mrb[0].mxu0
      %270 = vdwg.mxu0
      %271 = vmatprep.subr.mxu0 0.0
      %v272 = vand.u32 %v163, 4294901760
      %v273 = vsub.f32 %v163, %v272
      %v274 = vand.u32 %v273, 4294901760
      %v275 = vsub.f32 %v273, %v274
      %v276 = vand.u32 %v275, 4294901760
      %277 = vmatpush1.msra.mxu0 %v276
      %278 = vmatprep.subr.mxu0 0.0
      %v279 = vand.u32 %v164, 4294901760
      %v280 = vsub.f32 %v164, %v279
      %v281 = vand.u32 %v280, 4294901760
      %v282 = vsub.f32 %v280, %v281
      %v283 = vand.u32 %v282, 4294901760
      %284 = vmatpush1.msra.mxu0 %v283
      %285 = vmatprep.subr.mxu0 0.0
      %v286 = vand.u32 %v165, 4294901760
      %v287 = vsub.f32 %v165, %v286
      %v288 = vand.u32 %v287, 4294901760
      %v289 = vsub.f32 %v287, %v288
      %v290 = vand.u32 %v289, 4294901760
      %291 = vmatpush1.msra.mxu0 %v290
      %292 = vmatprep.subr.mxu0 0.0
      %v293 = vand.u32 %v166, 4294901760
      %v294 = vsub.f32 %v166, %v293
      %v295 = vand.u32 %v294, 4294901760
      %v296 = vsub.f32 %v294, %v295
      %v297 = vand.u32 %v296, 4294901760
      %298 = vmatpush1.msra.mxu0 %v297
      %299 = vmatprep.subr.mxu0 0.0
      %v300 = vand.u32 %v167, 4294901760
      %v301 = vsub.f32 %v167, %v300
      %v302 = vand.u32 %v301, 4294901760
      %v303 = vsub.f32 %v301, %v302
      %v304 = vand.u32 %v303, 4294901760
      %305 = vmatpush1.msra.mxu0 %v304
      %306 = vmatprep.subr.mxu0 0.0
      %v307 = vand.u32 %v168, 4294901760
      %v308 = vsub.f32 %v168, %v307
      %v309 = vand.u32 %v308, 4294901760
      %v310 = vsub.f32 %v308, %v309
      %v311 = vand.u32 %v310, 4294901760
      %312 = vmatpush1.msra.mxu0 %v311
      %313 = vmatprep.subr.mxu0 0.0
      %v314 = vand.u32 %v169, 4294901760
      %v315 = vsub.f32 %v169, %v314
      %v316 = vand.u32 %v315, 4294901760
      %v317 = vsub.f32 %v315, %v316
      %v318 = vand.u32 %v317, 4294901760
      %319 = vmatpush1.msra.mxu0 %v318
      %320 = vmatprep.subr.mxu0 0.0
      %v321 = vand.u32 %v170, 4294901760
      %v322 = vsub.f32 %v170, %v321
      %v323 = vand.u32 %v322, 4294901760
      %v324 = vsub.f32 %v322, %v323
      %v325 = vand.u32 %v324, 4294901760
      %326 = vmatpush1.msra.mxu0 %v325
      %327 = vmatprep.subr.mxu0 0.0
      %328 = vmatpush1.msra.mxu0 0.0
      %329 = vmatprep.subr.mxu0 0.0
      %330 = vmatpush1.msra.mxu0 0.0
      %331 = vmatprep.subr.mxu0 0.0
      %332 = vmatpush1.msra.mxu0 0.0
      %333 = vmatprep.subr.mxu0 0.0
      %334 = vmatpush1.msra.mxu0 0.0
      %335 = vmatprep.subr.mxu0 0.0
      %336 = vmatpush1.msra.mxu0 0.0
      %337 = vmatprep.subr.mxu0 0.0
      %338 = vmatpush1.msra.mxu0 0.0
      %339 = vmatprep.subr.mxu0 0.0
      %340 = vmatpush1.msra.mxu0 0.0
      %341 = vmatprep.subr.mxu0 0.0
      %342 = vmatpush1.msra.mxu0 0.0
      %343 = vmatprep.subr.mxu0 0.0
      %344 = vmatpush1.msra.mxu0 0.0
      %345 = vmatprep.subr.mxu0 0.0
      %346 = vmatpush1.msra.mxu0 0.0
      %347 = vmatprep.subr.mxu0 0.0
      %348 = vmatpush1.msra.mxu0 0.0
      %349 = vmatprep.subr.mxu0 0.0
      %350 = vmatpush1.msra.mxu0 0.0
      %351 = vmatprep.subr.mxu0 0.0
      %352 = vmatpush1.msra.mxu0 0.0
      %353 = vmatprep.subr.mxu0 0.0
      %354 = vmatpush1.msra.mxu0 0.0
      %355 = vmatprep.subr.mxu0 0.0
      %356 = vmatpush1.msra.mxu0 0.0
      %357 = vmatprep.subr.mxu0 0.0
      %358 = vmatpush1.msra.mxu0 0.0
      %359 = vmatprep.subr.mxu0 0.0
      %360 = vmatpush1.msra.mxu0 0.0
      %361 = vmatprep.subr.mxu0 0.0
      %362 = vmatpush1.msra.mxu0 0.0
      %363 = vmatprep.subr.mxu0 0.0
      %364 = vmatpush1.msra.mxu0 0.0
      %365 = vmatprep.subr.mxu0 0.0
      %366 = vmatpush1.msra.mxu0 0.0
      %367 = vmatprep.subr.mxu0 0.0
      %368 = vmatpush1.msra.mxu0 0.0
      %369 = vmatprep.subr.mxu0 0.0
      %370 = vmatpush1.msra.mxu0 0.0
      %371 = vmatprep.subr.mxu0 0.0
      %372 = vmatpush1.msra.mxu0 0.0
      %373 = vmatprep.subr.mxu0 0.0
      %374 = vmatpush1.msra.mxu0 0.0
      %375 = vmatprep.mubr.f32.mxu0 0.0
      %v376 = vand.u32 %v173, 4294901760
      %377 = vmatmul.mubr.f32.gmra.mrb[0].mxu0 %v376
      %v378 = vpop.f32.mrb[0].mxu0
      %v379 = vadd.f32 %v258, %v378
      %v380 = vpop.f32.mrb[0].mxu0
      %381 = vmatprep.mubr.f32.mxu0 0.0
      %v382 = vand.u32 %v176, 4294901760
      %383 = vmatmul.mubr.f32.gmra.mrb[0].mxu0 %v382
      %v384 = vpop.f32.mrb[0].mxu0
      %v385 = vadd.f32 %v268, %v384
      %v386 = vpop.f32.mrb[0].mxu0
      %387 = vdwg.mxu0
      %388 = vmatprep.subr.mxu0 0.0
      %v389 = vand.u32 %v163, 4294901760
      %v390 = vsub.f32 %v163, %v389
      %391 = vmatpush1.msra.mxu0 %v390
      %392 = vmatprep.subr.mxu0 0.0
      %v393 = vand.u32 %v164, 4294901760
      %v394 = vsub.f32 %v164, %v393
      %395 = vmatpush1.msra.mxu0 %v394
      %396 = vmatprep.subr.mxu0 0.0
      %v397 = vand.u32 %v165, 4294901760
      %v398 = vsub.f32 %v165, %v397
      %399 = vmatpush1.msra.mxu0 %v398
      %400 = vmatprep.subr.mxu0 0.0
      %v401 = vand.u32 %v166, 4294901760
      %v402 = vsub.f32 %v166, %v401
      %403 = vmatpush1.msra.mxu0 %v402
      %404 = vmatprep.subr.mxu0 0.0
      %v405 = vand.u32 %v167, 4294901760
      %v406 = vsub.f32 %v167, %v405
      %407 = vmatpush1.msra.mxu0 %v406
      %408 = vmatprep.subr.mxu0 0.0
      %v409 = vand.u32 %v168, 4294901760
      %v410 = vsub.f32 %v168, %v409
      %411 = vmatpush1.msra.mxu0 %v410
      %412 = vmatprep.subr.mxu0 0.0
      %v413 = vand.u32 %v169, 4294901760
      %v414 = vsub.f32 %v169, %v413
      %415 = vmatpush1.msra.mxu0 %v414
      %416 = vmatprep.subr.mxu0 0.0
      %v417 = vand.u32 %v170, 4294901760
      %v418 = vsub.f32 %v170, %v417
      %419 = vmatpush1.msra.mxu0 %v418
      %420 = vmatprep.subr.mxu0 0.0
      %421 = vmatpush1.msra.mxu0 0.0
      %422 = vmatprep.subr.mxu0 0.0
      %423 = vmatpush1.msra.mxu0 0.0
      %424 = vmatprep.subr.mxu0 0.0
      %425 = vmatpush1.msra.mxu0 0.0
      %426 = vmatprep.subr.mxu0 0.0
      %427 = vmatpush1.msra.mxu0 0.0
      %428 = vmatprep.subr.mxu0 0.0
      %429 = vmatpush1.msra.mxu0 0.0
      %430 = vmatprep.subr.mxu0 0.0
      %431 = vmatpush1.msra.mxu0 0.0
      %432 = vmatprep.subr.mxu0 0.0
      %433 = vmatpush1.msra.mxu0 0.0
      %434 = vmatprep.subr.mxu0 0.0
      %435 = vmatpush1.msra.mxu0 0.0
      %436 = vmatprep.subr.mxu0 0.0
      %437 = vmatpush1.msra.mxu0 0.0
      %438 = vmatprep.subr.mxu0 0.0
      %439 = vmatpush1.msra.mxu0 0.0
      %440 = vmatprep.subr.mxu0 0.0
      %441 = vmatpush1.msra.mxu0 0.0
      %442 = vmatprep.subr.mxu0 0.0
      %443 = vmatpush1.msra.mxu0 0.0
      %444 = vmatprep.subr.mxu0 0.0
      %445 = vmatpush1.msra.mxu0 0.0
      %446 = vmatprep.subr.mxu0 0.0
      %447 = vmatpush1.msra.mxu0 0.0
      %448 = vmatprep.subr.mxu0 0.0
      %449 = vmatpush1.msra.mxu0 0.0
      %450 = vmatprep.subr.mxu0 0.0
      %451 = vmatpush1.msra.mxu0 0.0
      %452 = vmatprep.subr.mxu0 0.0
      %453 = vmatpush1.msra.mxu0 0.0
      %454 = vmatprep.subr.mxu0 0.0
      %455 = vmatpush1.msra.mxu0 0.0
      %456 = vmatprep.subr.mxu0 0.0
      %457 = vmatpush1.msra.mxu0 0.0
      %458 = vmatprep.subr.mxu0 0.0
      %459 = vmatpush1.msra.mxu0 0.0
      %460 = vmatprep.subr.mxu0 0.0
      %461 = vmatpush1.msra.mxu0 0.0
      %462 = vmatprep.subr.mxu0 0.0
      %463 = vmatpush1.msra.mxu0 0.0
      %464 = vmatprep.subr.mxu0 0.0
      %465 = vmatpush1.msra.mxu0 0.0
      %466 = vmatprep.subr.mxu0 0.0
      %467 = vmatpush1.msra.mxu0 0.0
      %468 = vmatprep.mubr.f32.mxu0 0.0
      %v469 = vand.u32 %v173, 4294901760
      %v470 = vsub.f32 %v173, %v469
      %471 = vmatmul.mubr.f32.gmra.mrb[0].mxu0 %v470
      %v472 = vpop.f32.mrb[0].mxu0
      %v473 = vadd.f32 %v379, %v472
      %v474 = vpop.f32.mrb[0].mxu0
      %475 = vmatprep.mubr.f32.mxu0 0.0
      %v476 = vand.u32 %v176, 4294901760
      %v477 = vsub.f32 %v176, %v476
      %478 = vmatmul.mubr.f32.gmra.mrb[0].mxu0 %v477
      %v479 = vpop.f32.mrb[0].mxu0
      %v480 = vadd.f32 %v385, %v479
      %v481 = vpop.f32.mrb[0].mxu0
      %482 = vdwg.mxu0
      %483 = vmatprep.subr.mxu0 0.0
      %v484 = vand.u32 %v163, 4294901760
      %485 = vmatpush1.msra.mxu0 %v484
      %486 = vmatprep.subr.mxu0 0.0
      %v487 = vand.u32 %v164, 4294901760
      %488 = vmatpush1.msra.mxu0 %v487
      %489 = vmatprep.subr.mxu0 0.0
      %v490 = vand.u32 %v165, 4294901760
      %491 = vmatpush1.msra.mxu0 %v490
      %492 = vmatprep.subr.mxu0 0.0
      %v493 = vand.u32 %v166, 4294901760
      %494 = vmatpush1.msra.mxu0 %v493
      %495 = vmatprep.subr.mxu0 0.0
      %v496 = vand.u32 %v167, 4294901760
      %497 = vmatpush1.msra.mxu0 %v496
      %498 = vmatprep.subr.mxu0 0.0
      %v499 = vand.u32 %v168, 4294901760
      %500 = vmatpush1.msra.mxu0 %v499
      %501 = vmatprep.subr.mxu0 0.0
      %v502 = vand.u32 %v169, 4294901760
      %503 = vmatpush1.msra.mxu0 %v502
      %504 = vmatprep.subr.mxu0 0.0
      %v505 = vand.u32 %v170, 4294901760
      %506 = vmatpush1.msra.mxu0 %v505
      %507 = vmatprep.subr.mxu0 0.0
      %508 = vmatpush1.msra.mxu0 0.0
      %509 = vmatprep.subr.mxu0 0.0
      %510 = vmatpush1.msra.mxu0 0.0
      %511 = vmatprep.subr.mxu0 0.0
      %512 = vmatpush1.msra.mxu0 0.0
      %513 = vmatprep.subr.mxu0 0.0
      %514 = vmatpush1.msra.mxu0 0.0
      %515 = vmatprep.subr.mxu0 0.0
      %516 = vmatpush1.msra.mxu0 0.0
      %517 = vmatprep.subr.mxu0 0.0
      %518 = vmatpush1.msra.mxu0 0.0
      %519 = vmatprep.subr.mxu0 0.0
      %520 = vmatpush1.msra.mxu0 0.0
      %521 = vmatprep.subr.mxu0 0.0
      %522 = vmatpush1.msra.mxu0 0.0
      %523 = vmatprep.subr.mxu0 0.0
      %524 = vmatpush1.msra.mxu0 0.0
      %525 = vmatprep.subr.mxu0 0.0
      %526 = vmatpush1.msra.mxu0 0.0
      %527 = vmatprep.subr.mxu0 0.0
      %528 = vmatpush1.msra.mxu0 0.0
      %529 = vmatprep.subr.mxu0 0.0
      %530 = vmatpush1.msra.mxu0 0.0
      %531 = vmatprep.subr.mxu0 0.0
      %532 = vmatpush1.msra.mxu0 0.0
      %533 = vmatprep.subr.mxu0 0.0
      %534 = vmatpush1.msra.mxu0 0.0
      %535 = vmatprep.subr.mxu0 0.0
      %536 = vmatpush1.msra.mxu0 0.0
      %537 = vmatprep.subr.mxu0 0.0
      %538 = vmatpush1.msra.mxu0 0.0
      %539 = vmatprep.subr.mxu0 0.0
      %540 = vmatpush1.msra.mxu0 0.0
      %541 = vmatprep.subr.mxu0 0.0
      %542 = vmatpush1.msra.mxu0 0.0
      %543 = vmatprep.subr.mxu0 0.0
      %544 = vmatpush1.msra.mxu0 0.0
      %545 = vmatprep.subr.mxu0 0.0
      %546 = vmatpush1.msra.mxu0 0.0
      %547 = vmatprep.subr.mxu0 0.0
      %548 = vmatpush1.msra.mxu0 0.0
      %549 = vmatprep.subr.mxu0 0.0
      %550 = vmatpush1.msra.mxu0 0.0
      %551 = vmatprep.subr.mxu0 0.0
      %552 = vmatpush1.msra.mxu0 0.0
      %553 = vmatprep.subr.mxu0 0.0
      %554 = vmatpush1.msra.mxu0 0.0
      %555 = vmatprep.mubr.f32.mxu0 0.0
      %v556 = vand.u32 %v173, 4294901760
      %v557 = vsub.f32 %v173, %v556
      %v558 = vand.u32 %v557, 4294901760
      %559 = vmatmul.mubr.f32.gmra.mrb[0].mxu0 %v558
      %v560 = vpop.f32.mrb[0].mxu0
      %v561 = vadd.f32 %v473, %v560
      %v562 = vpop.f32.mrb[0].mxu0
      %563 = vmatprep.mubr.f32.mxu0 0.0
      %v564 = vand.u32 %v176, 4294901760
      %v565 = vsub.f32 %v176, %v564
      %v566 = vand.u32 %v565, 4294901760
      %567 = vmatmul.mubr.f32.gmra.mrb[0].mxu0 %v566
      %v568 = vpop.f32.mrb[0].mxu0
      %v569 = vadd.f32 %v480, %v568
      %v570 = vpop.f32.mrb[0].mxu0
      %571 = vdwg.mxu0
      %572 = vmatprep.subr.mxu0 0.0
      %v573 = vand.u32 %v163, 4294901760
      %v574 = vsub.f32 %v163, %v573
      %v575 = vand.u32 %v574, 4294901760
      %576 = vmatpush1.msra.mxu0 %v575
      %577 = vmatprep.subr.mxu0 0.0
      %v578 = vand.u32 %v164, 4294901760
      %v579 = vsub.f32 %v164, %v578
      %v580 = vand.u32 %v579, 4294901760
      %581 = vmatpush1.msra.mxu0 %v580
      %582 = vmatprep.subr.mxu0 0.0
      %v583 = vand.u32 %v165, 4294901760
      %v584 = vsub.f32 %v165, %v583
      %v585 = vand.u32 %v584, 4294901760
      %586 = vmatpush1.msra.mxu0 %v585
      %587 = vmatprep.subr.mxu0 0.0
      %v588 = vand.u32 %v166, 4294901760
      %v589 = vsub.f32 %v166, %v588
      %v590 = vand.u32 %v589, 4294901760
      %591 = vmatpush1.msra.mxu0 %v590
      %592 = vmatprep.subr.mxu0 0.0
      %v593 = vand.u32 %v167, 4294901760
      %v594 = vsub.f32 %v167, %v593
      %v595 = vand.u32 %v594, 4294901760
      %596 = vmatpush1.msra.mxu0 %v595
      %597 = vmatprep.subr.mxu0 0.0
      %v598 = vand.u32 %v168, 4294901760
      %v599 = vsub.f32 %v168, %v598
      %v600 = vand.u32 %v599, 4294901760
      %601 = vmatpush1.msra.mxu0 %v600
      %602 = vmatprep.subr.mxu0 0.0
      %v603 = vand.u32 %v169, 4294901760
      %v604 = vsub.f32 %v169, %v603
      %v605 = vand.u32 %v604, 4294901760
      %606 = vmatpush1.msra.mxu0 %v605
      %607 = vmatprep.subr.mxu0 0.0
      %v608 = vand.u32 %v170, 4294901760
      %v609 = vsub.f32 %v170, %v608
      %v610 = vand.u32 %v609, 4294901760
      %611 = vmatpush1.msra.mxu0 %v610
      %612 = vmatprep.subr.mxu0 0.0
      %613 = vmatpush1.msra.mxu0 0.0
      %614 = vmatprep.subr.mxu0 0.0
      %615 = vmatpush1.msra.mxu0 0.0
      %616 = vmatprep.subr.mxu0 0.0
      %617 = vmatpush1.msra.mxu0 0.0
      %618 = vmatprep.subr.mxu0 0.0
      %619 = vmatpush1.msra.mxu0 0.0
      %620 = vmatprep.subr.mxu0 0.0
      %621 = vmatpush1.msra.mxu0 0.0
      %622 = vmatprep.subr.mxu0 0.0
      %623 = vmatpush1.msra.mxu0 0.0
      %624 = vmatprep.subr.mxu0 0.0
      %625 = vmatpush1.msra.mxu0 0.0
      %626 = vmatprep.subr.mxu0 0.0
      %627 = vmatpush1.msra.mxu0 0.0
      %628 = vmatprep.subr.mxu0 0.0
      %629 = vmatpush1.msra.mxu0 0.0
      %630 = vmatprep.subr.mxu0 0.0
      %631 = vmatpush1.msra.mxu0 0.0
      %632 = vmatprep.subr.mxu0 0.0
      %633 = vmatpush1.msra.mxu0 0.0
      %634 = vmatprep.subr.mxu0 0.0
      %635 = vmatpush1.msra.mxu0 0.0
      %636 = vmatprep.subr.mxu0 0.0
      %637 = vmatpush1.msra.mxu0 0.0
      %638 = vmatprep.subr.mxu0 0.0
      %639 = vmatpush1.msra.mxu0 0.0
      %640 = vmatprep.subr.mxu0 0.0
      %641 = vmatpush1.msra.mxu0 0.0
      %642 = vmatprep.subr.mxu0 0.0
      %643 = vmatpush1.msra.mxu0 0.0
      %644 = vmatprep.subr.mxu0 0.0
      %645 = vmatpush1.msra.mxu0 0.0
      %646 = vmatprep.subr.mxu0 0.0
      %647 = vmatpush1.msra.mxu0 0.0
      %648 = vmatprep.subr.mxu0 0.0
      %649 = vmatpush1.msra.mxu0 0.0
      %650 = vmatprep.subr.mxu0 0.0
      %651 = vmatpush1.msra.mxu0 0.0
      %652 = vmatprep.subr.mxu0 0.0
      %653 = vmatpush1.msra.mxu0 0.0
      %654 = vmatprep.subr.mxu0 0.0
      %655 = vmatpush1.msra.mxu0 0.0
      %656 = vmatprep.subr.mxu0 0.0
      %657 = vmatpush1.msra.mxu0 0.0
      %658 = vmatprep.subr.mxu0 0.0
      %659 = vmatpush1.msra.mxu0 0.0
      %660 = vmatprep.mubr.f32.mxu0 0.0
      %v661 = vand.u32 %v173, 4294901760
      %662 = vmatmul.mubr.f32.gmra.mrb[0].mxu0 %v661
      %v663 = vpop.f32.mrb[0].mxu0
      %v664 = vadd.f32 %v561, %v663
      %v665 = vpop.f32.mrb[0].mxu0
      %666 = vmatprep.mubr.f32.mxu0 0.0
      %v667 = vand.u32 %v176, 4294901760
      %668 = vmatmul.mubr.f32.gmra.mrb[0].mxu0 %v667
      %v669 = vpop.f32.mrb[0].mxu0
      %v670 = vadd.f32 %v569, %v669
      %v671 = vpop.f32.mrb[0].mxu0
      %672 = vdwg.mxu0
      %673 = vmatprep.subr.mxu0 0.0
      %v674 = vand.u32 %v163, 4294901760
      %675 = vmatpush1.msra.mxu0 %v674
      %676 = vmatprep.subr.mxu0 0.0
      %v677 = vand.u32 %v164, 4294901760
      %678 = vmatpush1.msra.mxu0 %v677
      %679 = vmatprep.subr.mxu0 0.0
      %v680 = vand.u32 %v165, 4294901760
      %681 = vmatpush1.msra.mxu0 %v680
      %682 = vmatprep.subr.mxu0 0.0
      %v683 = vand.u32 %v166, 4294901760
      %684 = vmatpush1.msra.mxu0 %v683
      %685 = vmatprep.subr.mxu0 0.0
      %v686 = vand.u32 %v167, 4294901760
      %687 = vmatpush1.msra.mxu0 %v686
      %688 = vmatprep.subr.mxu0 0.0
      %v689 = vand.u32 %v168, 4294901760
      %690 = vmatpush1.msra.mxu0 %v689
      %691 = vmatprep.subr.mxu0 0.0
      %v692 = vand.u32 %v169, 4294901760
      %693 = vmatpush1.msra.mxu0 %v692
      %694 = vmatprep.subr.mxu0 0.0
      %v695 = vand.u32 %v170, 4294901760
      %696 = vmatpush1.msra.mxu0 %v695
      %697 = vmatprep.subr.mxu0 0.0
      %698 = vmatpush1.msra.mxu0 0.0
      %699 = vmatprep.subr.mxu0 0.0
      %700 = vmatpush1.msra.mxu0 0.0
      %701 = vmatprep.subr.mxu0 0.0
      %702 = vmatpush1.msra.mxu0 0.0
      %703 = vmatprep.subr.mxu0 0.0
      %704 = vmatpush1.msra.mxu0 0.0
      %705 = vmatprep.subr.mxu0 0.0
      %706 = vmatpush1.msra.mxu0 0.0
      %707 = vmatprep.subr.mxu0 0.0
      %708 = vmatpush1.msra.mxu0 0.0
      %709 = vmatprep.subr.mxu0 0.0
      %710 = vmatpush1.msra.mxu0 0.0
      %711 = vmatprep.subr.mxu0 0.0
      %712 = vmatpush1.msra.mxu0 0.0
      %713 = vmatprep.subr.mxu0 0.0
      %714 = vmatpush1.msra.mxu0 0.0
      %715 = vmatprep.subr.mxu0 0.0
      %716 = vmatpush1.msra.mxu0 0.0
      %717 = vmatprep.subr.mxu0 0.0
      %718 = vmatpush1.msra.mxu0 0.0
      %719 = vmatprep.subr.mxu0 0.0
      %720 = vmatpush1.msra.mxu0 0.0
      %721 = vmatprep.subr.mxu0 0.0
      %722 = vmatpush1.msra.mxu0 0.0
      %723 = vmatprep.subr.mxu0 0.0
      %724 = vmatpush1.msra.mxu0 0.0
      %725 = vmatprep.subr.mxu0 0.0
      %726 = vmatpush1.msra.mxu0 0.0
      %727 = vmatprep.subr.mxu0 0.0
      %728 = vmatpush1.msra.mxu0 0.0
      %729 = vmatprep.subr.mxu0 0.0
      %730 = vmatpush1.msra.mxu0 0.0
      %731 = vmatprep.subr.mxu0 0.0
      %732 = vmatpush1.msra.mxu0 0.0
      %733 = vmatprep.subr.mxu0 0.0
      %734 = vmatpush1.msra.mxu0 0.0
      %735 = vmatprep.subr.mxu0 0.0
      %736 = vmatpush1.msra.mxu0 0.0
      %737 = vmatprep.subr.mxu0 0.0
      %738 = vmatpush1.msra.mxu0 0.0
      %739 = vmatprep.subr.mxu0 0.0
      %740 = vmatpush1.msra.mxu0 0.0
      %741 = vmatprep.subr.mxu0 0.0
      %742 = vmatpush1.msra.mxu0 0.0
      %743 = vmatprep.subr.mxu0 0.0
      %744 = vmatpush1.msra.mxu0 0.0
      %745 = vmatprep.mubr.f32.mxu0 0.0
      %v746 = vand.u32 %v173, 4294901760
      %747 = vmatmul.mubr.f32.gmra.mrb[0].mxu0 %v746
      %v748 = vpop.f32.mrb[0].mxu0
      %v749 = vadd.f32 %v664, %v748
      %v750 = vpop.f32.mrb[0].mxu0
      %751 = vmatprep.mubr.f32.mxu0 0.0
      %v752 = vand.u32 %v176, 4294901760
      %753 = vmatmul.mubr.f32.gmra.mrb[0].mxu0 %v752
      %v754 = vpop.f32.mrb[0].mxu0
      %v755 = vadd.f32 %v670, %v754
      %v756 = vpop.f32.mrb[0].mxu0
      %757 = vdwg.mxu0
      %758 = vst [vmem:[%s145] sm:$0xff] %v749
      %759 = vst [vmem:[%s145 + $0x8] sm:$0xff] %v755
      %s760 = smul.u32 2, %s13
      %p761 = scmp.lt.s32.totalorder %s760, 5
      %s762 = scalar_select %p761, %s760, 5
      %s763 = smul.addr %s762, 8
      %s764 = scalar_lea.vmem %s2, %s763
      // Predicated region
      $region29: #{kmer_multiple_embedding.1} parent=27 // pred_check
        %p765 = pneg %p78
      $region30: #{kmer_multiple_embedding.1} parent=27 // pred_check_branch
        %767 = sbr.rel (%p765) target = $region32
      $region31: #{kmer_multiple_embedding.1} parent=27 // pred_region
        %s768 = smul.u32 2, %s13
      $region32: #{kmer_multiple_embedding.1} parent=27 // pred_fallthru
        _
    $region28: #{kmer_multiple_embedding.1} parent=5 // pred_fallthru
      _
    %p769 = scmp.le.s32.totalorder 2, %s8
    // Predicated region
    $region33: #{kmer_multiple_embedding.1} parent=5 // pred_check
      %p770 = pneg %p769
    $region34: #{kmer_multiple_embedding.1} parent=5 // pred_check_branch
      %772 = sbr.rel (%p770) target = $region36
    $region35: #{kmer_multiple_embedding.1} parent=5 // pred_region
      %s773 = ssub.s32 %s8, 2
      // Predicated region
      $region37: #{kmer_multiple_embedding.1} parent=35 // pred_check
        %p774 = pneg %p84
      $region38: #{kmer_multiple_embedding.1} parent=35 // pred_check_branch
        %776 = sbr.rel (%p774) target = $region40
      $region39: #{kmer_multiple_embedding.1} parent=35 // pred_region
        %s777 = smul.u32 2, %s14
        %p778 = scmp.lt.s32.totalorder %s777, 5
        %s779 = scalar_select %p778, %s777, 5
        %s780 = smul.addr %s779, 8
        %s781 = scalar_lea.vmem %s2, %s780
      $region40: #{kmer_multiple_embedding.1} parent=35 // pred_fallthru
        _
    $region36: #{kmer_multiple_embedding.1} parent=5 // pred_fallthru
      _
  $region6: #{kmer_multiple_embedding.1} parent=0 // loop_footer
    %s12 = sadd.s32 1, %s8
  $region7: #{kmer_multiple_embedding.1} parent=0 // loop_footer_branch
    %7 = sbr.rel target = $region3
  $region8: #{kmer_multiple_embedding.1} parent=0 // loop_exit
    _

</llo_original>
